<compile_context>
chip_gen: v5e
topology: v5e:2x2
jax: 0.10.0
libtpu: 0.0.40
codegen_flags: <defaults>
</compile_context>

<pallas_src>
import functools

import jax
import jax.numpy as jnp
from jax.experimental import pallas as pl
from jax.experimental.pallas import tpu as pltpu


def _dropout_kernel(seed_ref, x_ref, o_ref, *, p: float):
    tm, lanes = x_ref.shape
    blk = pl.program_id(0)

    # Global element index of every element in this block (row-major flat idx).
    # NOTE: for tensors > 2**32 elements the uint32 counter wraps; the hash
    # stream just repeats with a different offset, which is acceptable for
    # dropout masks (and such tensors would not fit on a single chip anyway).
    row = jax.lax.broadcasted_iota(jnp.int32, (tm, lanes), 0)
    col = jax.lax.broadcasted_iota(jnp.int32, (tm, lanes), 1)
    gidx = (blk * tm + row) * lanes + col

    # Counter-based RNG: murmur3 fmix32 finalizer of (index + seed * golden).
    # Pure 32-bit VPU integer ops; block-independent, so "parallel" is safe.
    z = gidx.astype(jnp.uint32) + seed_ref[0].astype(jnp.uint32) * jnp.uint32(0x9E3779B9)
    z = (z ^ (z >> 16)) * jnp.uint32(0x85EBCA6B)
    z = (z ^ (z >> 13)) * jnp.uint32(0xC2B2AE35)
    z = z ^ (z >> 16)

    # Drop iff z < p * 2**32  (bias-free uint32 threshold compare).
    threshold = jnp.uint32(min(int(round(p * 4294967296.0)), 4294967295))
    keep = z >= threshold

    x = x_ref[...]
    scale = jnp.asarray(1.0 / (1.0 - p), dtype=x.dtype)
    o_ref[...] = jnp.where(keep, x * scale, jnp.zeros_like(x))


def _choose_layout(total: int, dtype) -> tuple[int, int, int]:
    """Pick (lanes, tm, rows_padded) for a lane-dense 2-D slab."""
    itemsize = int(jnp.dtype(dtype).itemsize)
    # Native sublane packing: 8 rows for 4-byte, 16 for 2-byte, 32 for 1-byte.
    sub = max(8, 32 // max(itemsize, 1))
    # Wide lane dim for big tensors -> unmasked bulk stores, fewer DMAs/byte.
    if total >= (1 << 22):
        lanes = 1024
    elif total >= (1 << 18):
        lanes = 512
    else:
        lanes = 128
    rows = -(-total // lanes)
    # ~2 MiB blocks: big enough to amortize ~0.35 us/grid-step, small enough
    # that double-buffered in+out (4 blocks) stays well inside v7x scoped VMEM.
    target_rows = max(sub, ((2 << 20) // (lanes * itemsize)) // sub * sub)
    rows_rounded = -(-rows // sub) * sub
    tm = min(target_rows, rows_rounded)
    rows_padded = -(-rows // tm) * tm
    return lanes, tm, rows_padded


def _dropout_2d(x2d: jax.Array, p: float, seed_arr: jax.Array, *, tm: int) -> jax.Array:
    rows, lanes = x2d.shape
    assert rows % tm == 0
    itemsize = int(jnp.dtype(x2d.dtype).itemsize)
    block_bytes = tm * lanes * itemsize
    # 2 buffers x (in + out) x block, with slack; capped at v7x's scoped budget.
    vmem_limit = int(min(32 << 20, max(16 << 20, 4 * block_bytes + (1 << 20))))

    kernel = functools.partial(_dropout_kernel, p=p)
    return pl.pallas_call(
        kernel,
        out_shape=jax.ShapeDtypeStruct((rows, lanes), x2d.dtype),
        grid_spec=pltpu.PrefetchScalarGridSpec(
            num_scalar_prefetch=1,
            grid=(rows // tm,),
            in_specs=[pl.BlockSpec((tm, lanes), lambda i, seed_ref: (i, 0))],
            out_specs=pl.BlockSpec((tm, lanes), lambda i, seed_ref: (i, 0)),
        ),
        compiler_params=pltpu.CompilerParams(
            dimension_semantics=("parallel",),
            vmem_limit_bytes=vmem_limit,
        ),
        cost_estimate=pl.CostEstimate(
            flops=8 * rows * lanes,
            transcendentals=0,
            bytes_accessed=2 * rows * lanes * itemsize,
        ),
    )(seed_arr, x2d)


def fairseq_dropout(x: jax.Array,
                    p: float,
                    seed: int = 0,
                    training: bool = True,
                    apply_during_inference: bool = False) -> jax.Array:
    """JAX/Pallas equivalent of FairseqDropout.forward."""
    if not (training or apply_during_inference) or p == 0.0:
        return x
    if p >= 1.0:
        return jnp.zeros_like(x)

    orig_shape = x.shape
    flat = x.reshape(-1)
    total = flat.shape[0]

    lanes, tm, rows_padded = _choose_layout(total, x.dtype)
    padded_total = rows_padded * lanes
    if padded_total != total:
        # Only pay the pad copy when the flat size does not tile evenly.
        flat = jnp.pad(flat, (0, padded_total - total))

    x2d = flat.reshape(rows_padded, lanes)
    seed_arr = jnp.asarray([seed], dtype=jnp.int32)
    out2d = _dropout_2d(x2d, float(p), seed_arr, tm=tm)

    if padded_total != total:
        return out2d.reshape(-1)[:total].reshape(orig_shape)
    return out2d.reshape(orig_shape)


if __name__ == "__main__":
    key = jax.random.PRNGKey(0)
    # NCHW input consistent with typical fairseq usage of dropout on features.
    x = jax.random.normal(key, (2, 4, 16, 16), dtype=jnp.float32)
    p = 0.25

    # Training mode: dropout applied in the Pallas kernel.
    y_train = fairseq_dropout(x, p, seed=42, training=True)
    y_train = jax.block_until_ready(y_train)

    # Eval mode: identity (matches PyTorch module when not training).
    y_eval = fairseq_dropout(x, p, seed=42, training=False)
    y_eval = jax.block_until_ready(y_eval)

    # Sanity checks of dropout semantics.
    assert y_train.shape == x.shape and y_train.dtype == x.dtype
    assert bool(jnp.all(y_eval == x))
    kept_ok = jnp.all(
        jnp.where(y_train != 0.0,
                  jnp.abs(y_train - x / (1.0 - p)) < 1e-5, True))
    assert bool(kept_ok)
    dropped = float(jnp.mean((y_train == 0.0).astype(jnp.float32)))
    # Drop rate should be roughly p (loose bound for a small sample).
    assert 0.05 < dropped < 0.6

    print("KERNEL_OK")
</pallas_src>

<mosaic_0001>
module attributes {stable_mosaic.version = 11 : i64} {
  func.func @_dropout_kernel(%arg0: i32, %arg1: memref<1xi32, #tpu.memory_space<smem>>, %arg2: memref<16x128xf32, #tpu.memory_space<vmem>>, %arg3: memref<16x128xf32, #tpu.memory_space<vmem>>) attributes {dimension_semantics = [#tpu.dimension_semantics<parallel>], iteration_bounds = array<i64: 1>, scalar_prefetch = 1 : i64, scratch_operands = 0 : i64, tpu.core_type = #tpu.core_type<tc>, window_params = [{transform_indices = @transform_0, window_bounds = array<i64: 16, 128>}, {transform_indices = @transform_1, window_bounds = array<i64: 16, 128>}]} {
    %0 = tpu.iota {dimensions = array<i32: 0>} : vector<16x128xi32>
    %1 = tpu.iota {dimensions = array<i32: 1>} : vector<16x128xi32>
    %c16_i32 = arith.constant 16 : i32
    %2 = arith.muli %arg0, %c16_i32 : i32
    %3 = vector.broadcast %2 : i32 to vector<16x128xi32>
    %4 = arith.addi %3, %0 : vector<16x128xi32>
    %c128_i32 = arith.constant 128 : i32
    %5 = vector.broadcast %c128_i32 : i32 to vector<16x128xi32>
    %6 = arith.muli %4, %5 : vector<16x128xi32>
    %7 = arith.addi %6, %1 : vector<16x128xi32>
    %c0 = arith.constant 0 : index
    %8 = memref.load %arg1[%c0] : memref<1xi32, #tpu.memory_space<smem>>
    %c-1640531527_i32 = arith.constant -1640531527 : i32
    %9 = arith.muli %8, %c-1640531527_i32 : i32
    %10 = vector.broadcast %9 : i32 to vector<16x128xi32>
    %11 = arith.addi %7, %10 : vector<16x128xi32>
    %c16_i32_0 = arith.constant 16 : i32
    %12 = vector.broadcast %c16_i32_0 : i32 to vector<16x128xi32>
    %13 = arith.shrui %11, %12 : vector<16x128xi32>
    %14 = arith.xori %11, %13 : vector<16x128xi32>
    %c-2048144789_i32 = arith.constant -2048144789 : i32
    %15 = vector.broadcast %c-2048144789_i32 : i32 to vector<16x128xi32>
    %16 = arith.muli %14, %15 : vector<16x128xi32>
    %c13_i32 = arith.constant 13 : i32
    %17 = vector.broadcast %c13_i32 : i32 to vector<16x128xi32>
    %18 = arith.shrui %16, %17 : vector<16x128xi32>
    %19 = arith.xori %16, %18 : vector<16x128xi32>
    %c-1028477387_i32 = arith.constant -1028477387 : i32
    %20 = vector.broadcast %c-1028477387_i32 : i32 to vector<16x128xi32>
    %21 = arith.muli %19, %20 : vector<16x128xi32>
    %c16_i32_1 = arith.constant 16 : i32
    %22 = vector.broadcast %c16_i32_1 : i32 to vector<16x128xi32>
    %23 = arith.shrui %21, %22 : vector<16x128xi32>
    %24 = arith.xori %21, %23 : vector<16x128xi32>
    %c1073741824_i32 = arith.constant 1073741824 : i32
    %25 = vector.broadcast %c1073741824_i32 : i32 to vector<16x128xi32>
    %26 = arith.cmpi uge, %24, %25 : vector<16x128xi32>
    %c0_2 = arith.constant 0 : index
    %c0_3 = arith.constant 0 : index
    %27 = vector.load %arg2[%c0_2, %c0_3] : memref<16x128xf32, #tpu.memory_space<vmem>>, vector<16x128xf32>
    %cst = arith.constant 1.33333337 : f32
    %28 = vector.broadcast %cst : f32 to vector<16x128xf32>
    %29 = arith.mulf %27, %28 : vector<16x128xf32>
    %cst_4 = arith.constant 0.000000e+00 : f32
    %30 = vector.broadcast %cst_4 : f32 to vector<16x128xf32>
    %31 = arith.select %26, %29, %30 : vector<16x128xi1>, vector<16x128xf32>
    %c0_5 = arith.constant 0 : index
    %c0_6 = arith.constant 0 : index
    %32 = vector.load %arg3[%c0_5, %c0_6] : memref<16x128xf32, #tpu.memory_space<vmem>>, vector<16x128xf32>
    tpu.vector_store %arg3[%c0_5, %c0_6], %31 {strides = array<i32>} : memref<16x128xf32, #tpu.memory_space<vmem>>, vector<16x128xf32>,
    return
  }
  func.func @transform_0(%arg0: i32, %arg1: memref<1xi32, #tpu.memory_space<smem>>) -> (i32, i32) {
    %c0_i32 = arith.constant 0 : i32
    %c0_i32_0 = arith.constant 0 : i32
    return %arg0, %c0_i32 : i32, i32
  }
  func.func @transform_1(%arg0: i32, %arg1: memref<1xi32, #tpu.memory_space<smem>>) -> (i32, i32) {
    %c0_i32 = arith.constant 0 : i32
    %c0_i32_0 = arith.constant 0 : i32
    return %arg0, %c0_i32 : i32, i32
  }
}

</mosaic_0001>

<llo_original>
// kernel: tpu_custom_call.1
$region0: #{tpu_custom_call.1}
  #allocation0 [shape = 'u32[]', space=smem, size = 0x4, offset = 0x4, fixed_abs, tag = 'smem constant byte address 0x4 - core index']
  #allocation1 [shape = 'u32[72,128]{1,0:T(1,128)}', space=vmem, size = 0x9000, scoped, tag = 'internal scratch']
  #allocation2 [shape = 's32[1]{0}', space=sflag, size = 0x4, scoped, tag = 'scoped memory for tpu_custom_call.1']
  #allocation3 [shape = 's32[1]{0:T(128)S(6)}', space=smem, size = 0x200, scoped, tag = 'prefetched SMEM operand 0']
  %s0 = inlined_call_operand.<no memory space> [shape: s32[1], index: 0, kind: input, shape index: {}]
  %s1 = inlined_call_operand.hbm [shape: f32[16,128], index: 1, kind: input, shape index: {}]
  %s2 = inlined_call_operand.hbm [shape: f32[16,128], index: 2, kind: output, shape index: {}]
  %s3 = sld [smem:[#allocation0]]
  $region18: #{tpu_custom_call.1} parent=0
    _
  %s5 = ssub.s32 1, %s3
  %s6 = scalar_select 0, %s5, %s3
  %7 = sst [smem:[#allocation3]] %s0
  $region1: #{tpu_custom_call.1} parent=0
    #allocation4 [shape = 'u8[8192]{0}', space=vmem, size = 0x2000, scoped, tag = 'input window, operand 1, single buffered']
    #allocation5 [shape = 's32[1]{0}', space=sflag, size = 0x4, scoped, tag = 'scoped memory for tpu_custom_call.1']
    #allocation6 [shape = 's32[1]{0}', space=sflag, size = 0x4, scoped, tag = 'scoped memory for tpu_custom_call.1']
    #allocation7 [shape = 'u8[8192]{0}', space=vmem, size = 0x2000, scoped, tag = 'output window, operand 0, single buffered']
    %8 = vsyncpa [#allocation5], 0
    %9 = vsyncpa [#allocation6], 0
    // Predicated region
    $region2: #{tpu_custom_call.1} parent=1 // pred_check
      _
    $region3: #{tpu_custom_call.1} parent=1 // pred_check_branch
      %11 = sbr.rel (0) target = $region5
    $region4: #{tpu_custom_call.1} parent=1 // pred_region
      %13 = vsyncadd [#allocation5], 0
      %s14 = sshll.u32 %s1, 4
      %s15 = int_to_ptr.hbm [resolvable:$true] %s14
      %s16 = sshll.u32 [#allocation4], 4
      %s17 = int_to_ptr.vmem [resolvable:$true] %s16
      %22 = dma.hbm_to_vmem [thread:$0]  %s15, 256, %s17, [#allocation5], 128, 128, 8
    $region5: #{tpu_custom_call.1} parent=1 // pred_fallthru
      _
    // Predicated region
    $region6: #{tpu_custom_call.1} parent=1 // pred_check
      _
    $region7: #{tpu_custom_call.1} parent=1 // pred_check_branch
      %24 = sbr.rel (0) target = $region9
    $region8: #{tpu_custom_call.1} parent=1 // pred_region
      %26 = dma.done [#allocation5], 256
    $region9: #{tpu_custom_call.1} parent=1 // pred_fallthru
      _
    %v27 = vlaneseq
    %v28 = vshrl.u32 %v27, 7
    %v29 = vadd.s32 %v28, 8
    %v30 = vlaneseq
    %v31 = vand.u32 %v30, 127
    %s32 = smul.u32 0, 16
    %v33 = vstv %s32
    %v34 = vadd.s32 %v33, %v28
    %v35 = vadd.s32 %v33, %v29
    %v36 = vmul.u32 %v34, 128
    %v37 = vmul.u32 %v35, 128
    %v38 = vadd.s32 %v36, %v31
    %v39 = vadd.s32 %v37, %v31
    %s40 = sld [smem:[#allocation3]]
    %s41 = smul.u32 %s40, 2654435769
    %v42 = vstv %s41
    %v43 = vadd.s32 %v38, %v42
    %v44 = vadd.s32 %v39, %v42
    %v45 = vshrl.u32 %v43, 16
    %v46 = vshrl.u32 %v44, 16
    %v47 = vxor.u32 %v43, %v45
    %v48 = vxor.u32 %v44, %v46
    %v49 = vmul.u32 %v47, 2246822507
    %v50 = vmul.u32 %v48, 2246822507
    %v51 = vshrl.u32 %v49, 13
    %v52 = vshrl.u32 %v50, 13
    %v53 = vxor.u32 %v49, %v51
    %v54 = vxor.u32 %v50, %v52
    %v55 = vmul.u32 %v53, 3266489909
    %v56 = vmul.u32 %v54, 3266489909
    %v57 = vshrl.u32 %v55, 16
    %v58 = vshrl.u32 %v56, 16
    %v59 = vxor.u32 %v55, %v57
    %v60 = vxor.u32 %v56, %v58
    %v61 = vadd.s32 %v59, 2147483648
    %vm63 = vcmp.ge.s32.totalorder %v61, 3221225472
    %v64 = vadd.s32 %v60, 2147483648
    %vm66 = vcmp.ge.s32.totalorder %v64, 3221225472
    %v67 = vld [vmem:[#allocation4] sm:$0xff]
    %v68 = vld [vmem:[#allocation4 + $0x8] sm:$0xff]
    %v69 = vmul.f32 %v67, 1.3333334
    %v70 = vmul.f32 %v68, 1.3333334
    %v71 = vsel %vm63, %v69, 0.0
    %v72 = vsel %vm66, %v70, 0.0
    %73 = vst [vmem:[#allocation7] sm:$0xff] %v71
    %74 = vst [vmem:[#allocation7 + $0x8] sm:$0xff] %v72
    // Predicated region
    $region10: #{tpu_custom_call.1} parent=1 // pred_check
      _
    $region11: #{tpu_custom_call.1} parent=1 // pred_check_branch
      %76 = sbr.rel (0) target = $region13
    $region12: #{tpu_custom_call.1} parent=1 // pred_region
      %78 = vsyncadd [#allocation6], 0
      %s79 = sshll.u32 [#allocation7], 4
      %s80 = int_to_ptr.vmem [resolvable:$true] %s79
      %s81 = sshll.u32 %s2, 4
      %s82 = int_to_ptr.hbm [resolvable:$true] %s81
      %87 = dma.vmem_to_hbm [thread:$0]  %s80, 256, %s82, [#allocation6], 128, 128, 8
    $region13: #{tpu_custom_call.1} parent=1 // pred_fallthru
      _
    // Predicated region
    $region14: #{tpu_custom_call.1} parent=1 // pred_check
      _
    $region15: #{tpu_custom_call.1} parent=1 // pred_check_branch
      %89 = sbr.rel (0) target = $region17
    $region16: #{tpu_custom_call.1} parent=1 // pred_region
      %91 = dma.done [#allocation6], 256
    $region17: #{tpu_custom_call.1} parent=1 // pred_fallthru
      _
    %92 = vsyncpa [#allocation5], 1
    %93 = vsyncpa [#allocation6], 1

</llo_original>
